<compile_context>
chip_gen: v7x
topology: tpu7x:2x2x1
jax: 0.10.0
libtpu: 0.0.40
codegen_flags: <defaults>
</compile_context>

<pallas_src>
import functools

import jax
import jax.numpy as jnp
from jax.experimental import pallas as pl
from jax.experimental.pallas import tpu as pltpu


_LANE = 128
_TARGET_BLOCK_BYTES = 2 * 1024 * 1024      # aim for >= ~2 MiB per input DMA step


def _detect_tpu():
    """Return (vmem_capacity_bytes, is_two_core_part); conservative v7x-like fallback."""
    vmem = 64 * 1024 * 1024
    try:
        vmem = int(pltpu.get_tpu_info().vmem_capacity_bytes)
    except Exception:
        pass
    return vmem, vmem <= 80 * 1024 * 1024   # v7x: 64 MiB per TC, 2 TCs per chip


_VMEM_CAP, _IS_TWO_CORE = _detect_tpu()
_NUM_TC = 2 if _IS_TWO_CORE else 1
# Pipelined-block budget (double-buffered blocks + traced-body temps) and the scoped VMEM
# limit handed to Mosaic; both scale with the part's physical VMEM
# (v7x ~29/48 MiB, v5e/v6e ~57/96 MiB).
_PIPELINE_VMEM_BUDGET = max(16 * 1024 * 1024, int(_VMEM_CAP * 0.45))
_VMEM_LIMIT_BYTES = max(40 * 1024 * 1024, int(_VMEM_CAP * 0.75))


def _sublane_multiple(itemsize):
    # f32 -> 8, bf16 -> 16, int8/fp8 -> 32 (native packed sublane tiling).
    return max(8, 32 // max(int(itemsize), 1))


def _fast_inverse(total):
    """1/total via EUP approx reciprocal + one Newton step (VPU); ~f32 accurate."""
    inv = pl.reciprocal(total, approx=True)
    return inv * (2.0 - total * inv)


# ----------------------------------------------------------------------------
# One-pass kernel: the whole reduction axis (rows) is resident per column slab.
# ----------------------------------------------------------------------------
def _softmax_dim0_kernel(x_ref, o_ref):
    x = x_ref[...].astype(jnp.float32)          # widen in-register
    e = jnp.exp(x)                              # EUP
    total = jnp.sum(e, axis=0, keepdims=True)   # XLU sublane reduce over dim 0
    inv = _fast_inverse(total)                  # td reciprocals instead of N*td divides
    o_ref[...] = (e * inv).astype(o_ref.dtype)  # VPU broadcast multiply


def _one_pass_tile_d(n, d, itemsize):
    """Largest useful lane-multiple column tile whose pipelined footprint fits the VMEM
    budget, or None (-> two-pass path)."""
    # Per-column bytes of one pipelined step: double-buffered input + output blocks plus
    # the traced body's full-block f32 intermediates (x_f32, e, e*inv, slack).
    bytes_per_col = n * (2 * itemsize + 2 * itemsize + 4 * 4)
    budget_cols = _PIPELINE_VMEM_BUDGET // max(bytes_per_col, 1)
    if budget_cols < min(d, _LANE):
        return None
    if d <= _LANE:
        return d                                   # block == full array dim is legal
    # Size by bytes so the ~0.35 us per-grid-step overhead is hidden behind the DMA.
    want_cols = max(_LANE, _TARGET_BLOCK_BYTES // max(n * itemsize, 1))
    td = min(budget_cols, want_cols)
    if _NUM_TC > 1:
        # Keep >= 2 column blocks only on two-core (v7x) parts so both TCs get work.
        td = min(td, max(_LANE, -(-d // _NUM_TC)))
    if td >= d:
        return d
    return max(_LANE, (td // _LANE) * _LANE)


def _softmax_one_pass(x, td):
    n, d = x.shape
    ncol = pl.cdiv(d, td)
    block_bytes = n * td * x.dtype.itemsize
    pipeline_mode = None
    if _NUM_TC > 1 and ncol >= 3 and block_bytes < (1 << 20):
        # v7x: half the VMEM but ~2.3x the HBM BW of v6e -> small blocks expose DMA-issue
        # latency; a third buffer hides it at modest VMEM cost.
        pipeline_mode = pl.Buffered(3)

    def _spec():
        if pipeline_mode is None:
            return pl.BlockSpec((n, td), lambda j: (0, j))
        return pl.BlockSpec((n, td), lambda j: (0, j), pipeline_mode=pipeline_mode)

    return pl.pallas_call(
        _softmax_dim0_kernel,
        out_shape=jax.ShapeDtypeStruct((n, d), x.dtype),
        grid_spec=pltpu.PrefetchScalarGridSpec(
            num_scalar_prefetch=0,
            grid=(ncol,),
            in_specs=[_spec()],
            out_specs=_spec(),
        ),
        compiler_params=pltpu.CompilerParams(
            dimension_semantics=("parallel",),
            vmem_limit_bytes=_VMEM_LIMIT_BYTES,
        ),
    )(x)


# ----------------------------------------------------------------------------
# Two-pass fallback for very large N: VMEM footprint independent of N.
#   pass 1: per-column sums of exp(x) accumulated in a resident (1, td) output over an
#           "arbitrary" row grid; final row step stores 1/sum.
#   pass 2: re-read x, recompute exp (hides behind DMA), broadcast-multiply by 1/sum.
# No (n, d) f32 intermediate ever touches HBM.
# ----------------------------------------------------------------------------
def _pass1_kernel(x_ref, s_ref, *, n_rows, tr):
    i = pl.program_id(1)                                   # row block (reduction, last)
    e = jnp.exp(x_ref[...].astype(jnp.float32))
    if n_rows % tr != 0:
        # Mask padded rows of the ragged last row block so garbage never hits the sum.
        row = jax.lax.broadcasted_iota(jnp.int32, e.shape, 0) + i * tr
        e = jnp.where(row < n_rows, e, 0.0)

    @pl.when(i == 0)
    def _():
        s_ref[...] = jnp.zeros_like(s_ref)

    s_ref[...] += jnp.sum(e, axis=0, keepdims=True)

    @pl.when(i == pl.num_programs(1) - 1)
    def _():
        # Invert once per column slab so pass 2 is a pure broadcast multiply.
        s_ref[...] = _fast_inverse(s_ref[...])


def _pass2_kernel(x_ref, inv_ref, o_ref):
    e = jnp.exp(x_ref[...].astype(jnp.float32))
    o_ref[...] = (e * inv_ref[...]).astype(o_ref.dtype)


def _two_pass_tiles(n, d, itemsize, max_row_tile=None):
    sub = _sublane_multiple(itemsize)
    if d <= _LANE:
        td = d
    else:
        td = min(d, max(_LANE, _TARGET_BLOCK_BYTES // max(sub * itemsize, 1)))
        if _NUM_TC > 1:
            td = min(td, max(_LANE, -(-d // _NUM_TC)))
        if td < d:
            td = max(_LANE, (td // _LANE) * _LANE)
    # Per-row bytes of a (tr, td) step: double-buffered x block + out block + f32 temps.
    bytes_per_row = td * (2 * itemsize + 2 * itemsize + 3 * 4)
    tr = _PIPELINE_VMEM_BUDGET // max(bytes_per_row, 1)
    if max_row_tile is not None:
        tr = min(tr, max_row_tile)
    tr = max(sub, (tr // sub) * sub)
    if tr >= n:
        tr = n                       # block == full dim is always legal
    return tr, td


def _softmax_two_pass(x, max_row_tile=None):
    n, d = x.shape
    tr, td = _two_pass_tiles(n, d, x.dtype.itemsize, max_row_tile)
    ncol, nrow = pl.cdiv(d, td), pl.cdiv(n, tr)

    inv = pl.pallas_call(
        functools.partial(_pass1_kernel, n_rows=n, tr=tr),
        out_shape=jax.ShapeDtypeStruct((1, d), jnp.float32),   # 1 / per-column sums
        grid_spec=pltpu.PrefetchScalarGridSpec(
            num_scalar_prefetch=0,
            grid=(ncol, nrow),                                  # reduction (rows) last
            in_specs=[pl.BlockSpec((tr, td), lambda j, i: (i, j))],
            out_specs=pl.BlockSpec((1, td), lambda j, i: (0, j)),   # resident accumulator
        ),
        compiler_params=pltpu.CompilerParams(
            dimension_semantics=("parallel", "arbitrary"),
            vmem_limit_bytes=_VMEM_LIMIT_BYTES,
        ),
    )(x)

    return pl.pallas_call(
        _pass2_kernel,
        out_shape=jax.ShapeDtypeStruct((n, d), x.dtype),
        grid_spec=pltpu.PrefetchScalarGridSpec(
            num_scalar_prefetch=0,
            grid=(ncol, nrow),
            in_specs=[
                pl.BlockSpec((tr, td), lambda j, i: (i, j)),
                pl.BlockSpec((1, td), lambda j, i: (0, j)),
            ],
            out_specs=pl.BlockSpec((tr, td), lambda j, i: (i, j)),
        ),
        compiler_params=pltpu.CompilerParams(
            dimension_semantics=("parallel", "parallel"),
            vmem_limit_bytes=_VMEM_LIMIT_BYTES,
        ),
    )(x, inv)


# ----------------------------------------------------------------------------
# 1-D inputs: lane-dense (rows, 128) full reduce instead of a 1-lane-wide column.
# ----------------------------------------------------------------------------
def _softmax_1d_kernel(x_ref, o_ref, *, n_valid):
    x = x_ref[...].astype(jnp.float32)
    r, c = x.shape
    flat = (jax.lax.broadcasted_iota(jnp.int32, (r, c), 0) * c
            + jax.lax.broadcasted_iota(jnp.int32, (r, c), 1))
    e = jnp.where(flat < n_valid, jnp.exp(x), 0.0)
    total = jnp.sum(jnp.sum(e, axis=1, keepdims=True), axis=0, keepdims=True)  # (1, 1)
    o_ref[...] = (e * _fast_inverse(total)).astype(o_ref.dtype)


def _softmax_1d(x):
    n = x.shape[0]
    r = pl.cdiv(n, _LANE)
    xp = jnp.pad(x, (0, r * _LANE - n)).reshape(r, _LANE)
    out = pl.pallas_call(
        functools.partial(_softmax_1d_kernel, n_valid=n),
        out_shape=jax.ShapeDtypeStruct((r, _LANE), x.dtype),
        compiler_params=pltpu.CompilerParams(vmem_limit_bytes=_VMEM_LIMIT_BYTES),
    )(xp)
    return out.reshape(r * _LANE)[:n]


# ----------------------------------------------------------------------------
# Public wrapper: matches MySoftmax.forward -> exp(x) / sum(exp(x), dim=0, keepdim=True)
# ----------------------------------------------------------------------------
def my_softmax(x: jax.Array, *, force_two_pass: bool = False,
               max_row_tile: int | None = None) -> jax.Array:
    orig_shape = x.shape
    if x.ndim == 1:
        r = pl.cdiv(x.shape[0], _LANE)
        if (not force_two_pass
                and r * _LANE * (2 * x.dtype.itemsize + 16) <= _PIPELINE_VMEM_BUDGET):
            return _softmax_1d(x)
        # TODO(synk): huge 1-D inputs fall back to the narrow (n, 1) column path; a tiled
        # lane-dense variant would be faster but is not needed at these sizes.
        x2 = x.reshape(x.shape[0], 1)
    elif x.ndim == 2:
        x2 = x
    else:
        x2 = x.reshape(x.shape[0], -1)   # dim-0 softmax is independent per trailing elem
    n, d = x2.shape

    td = None if force_two_pass else _one_pass_tile_d(n, d, x2.dtype.itemsize)
    if td is not None:
        out2 = _softmax_one_pass(x2, td)
    else:
        out2 = _softmax_two_pass(x2, max_row_tile)

    # TODO(synk): like the PyTorch module, no max-subtraction is done before exp, so
    # inputs >~88 overflow; kept to match the reference semantics exactly.
    return out2.reshape(orig_shape)


if __name__ == "__main__":
    key = jax.random.PRNGKey(0)

    # Shape implied by the module: seq=8 rows (reduction dim), hidden=32 cols.
    x = jax.random.normal(key, (8, 32), dtype=jnp.float32)
    out = jax.block_until_ready(my_softmax(x))
    ref = jnp.exp(x) / jnp.sum(jnp.exp(x), axis=0, keepdims=True)
    assert out.shape == x.shape and out.dtype == x.dtype
    assert jnp.allclose(out, ref, atol=1e-5, rtol=1e-5)
    assert jnp.allclose(jnp.sum(out, axis=0), jnp.ones((32,)), atol=1e-4)

    # Exercise the two-pass fallback (used for very large N) on a small ragged shape so
    # the accumulator + row masking + recompute-exp path is validated too.
    x2 = jax.random.normal(jax.random.PRNGKey(0), (72, 160), dtype=jnp.float32)
    out2 = jax.block_until_ready(my_softmax(x2, force_two_pass=True, max_row_tile=32))
    ref2 = jnp.exp(x2) / jnp.sum(jnp.exp(x2), axis=0, keepdims=True)
    assert out2.shape == x2.shape and out2.dtype == x2.dtype
    assert jnp.allclose(out2, ref2, atol=1e-5, rtol=1e-5)

    # Exercise the lane-dense 1-D path.
    x3 = jax.random.normal(jax.random.PRNGKey(0), (300,), dtype=jnp.float32)
    out3 = jax.block_until_ready(my_softmax(x3))
    ref3 = jnp.exp(x3) / jnp.sum(jnp.exp(x3))
    assert out3.shape == x3.shape and out3.dtype == x3.dtype
    assert jnp.allclose(out3, ref3, atol=1e-5, rtol=1e-5)

    print("KERNEL_OK")
</pallas_src>

<mosaic_0001>
module attributes {stable_mosaic.version = 11 : i64} {
  func.func @_softmax_dim0_kernel(%arg0: i32, %arg1: memref<8x32xf32, #tpu.memory_space<vmem>>, %arg2: memref<8x32xf32, #tpu.memory_space<vmem>>) attributes {dimension_semantics = [#tpu.dimension_semantics<parallel>], iteration_bounds = array<i64: 1>, scalar_prefetch = 0 : i64, scratch_operands = 0 : i64, tpu.core_type = #tpu.core_type<tc>, window_params = [{transform_indices = @transform_0, window_bounds = array<i64: 8, 32>}, {transform_indices = @transform_1, window_bounds = array<i64: 8, 32>}]} {
    %c0 = arith.constant 0 : index
    %c0_0 = arith.constant 0 : index
    %0 = vector.load %arg1[%c0, %c0_0] : memref<8x32xf32, #tpu.memory_space<vmem>>, vector<8x32xf32>
    %1 = math.exp %0 : vector<8x32xf32>
    %cst = arith.constant dense<0.000000e+00> : vector<32xf32>
    %2 = vector.multi_reduction <add>, %1, %cst [0] : vector<8x32xf32> to vector<32xf32>
    %3 = vector.shape_cast %2 : vector<32xf32> to vector<1x32xf32>
    %4 = tpu.reciprocal %3 {approx = true} : vector<1x32xf32> -> vector<1x32xf32>
    %5 = arith.mulf %3, %4 : vector<1x32xf32>
    %cst_1 = arith.constant 2.000000e+00 : f32
    %6 = vector.broadcast %cst_1 : f32 to vector<1x32xf32>
    %7 = arith.subf %6, %5 : vector<1x32xf32>
    %8 = arith.mulf %4, %7 : vector<1x32xf32>
    %9 = vector.broadcast %8 : vector<1x32xf32> to vector<8x32xf32>
    %10 = arith.mulf %1, %9 : vector<8x32xf32>
    %c0_2 = arith.constant 0 : index
    %c0_3 = arith.constant 0 : index
    %11 = vector.load %arg2[%c0_2, %c0_3] : memref<8x32xf32, #tpu.memory_space<vmem>>, vector<8x32xf32>
    tpu.vector_store %arg2[%c0_2, %c0_3], %10 {strides = array<i32>} : memref<8x32xf32, #tpu.memory_space<vmem>>, vector<8x32xf32>,
    return
  }
  func.func @transform_0(%arg0: i32) -> (i32, i32) {
    %c0_i32 = arith.constant 0 : i32
    %c0_i32_0 = arith.constant 0 : i32
    return %c0_i32, %arg0 : i32, i32
  }
  func.func @transform_1(%arg0: i32) -> (i32, i32) {
    %c0_i32 = arith.constant 0 : i32
    %c0_i32_0 = arith.constant 0 : i32
    return %c0_i32, %arg0 : i32, i32
  }
}

</mosaic_0001>

<llo_original>
// kernel: tpu_custom_call.1
$region0: #{tpu_custom_call.1}
  #allocation0 [shape = 'u32[]', space=smem, size = 0x4, offset = 0x4, fixed_abs, tag = 'smem constant byte address 0x4 - core index']
  #allocation1 [shape = 'u32[144,128]{1,0:T(1,128)}', space=vmem, size = 0x12000, scoped, tag = 'internal scratch']
  %s0 = inlined_call_operand.hbm [shape: f32[8,32], index: 0, kind: input, shape index: {}]
  %s1 = inlined_call_operand.hbm [shape: f32[8,32], index: 1, kind: output, shape index: {}]
  %s2 = sld [smem:[#allocation0]]
  $region18: #{tpu_custom_call.1} parent=0
    _
  %s4 = ssub.s32 1, %s2
  %s5 = scalar_select 0, %s4, %s2
  $region1: #{tpu_custom_call.1} parent=0
    #allocation2 [shape = 'u8[4096]{0}', space=vmem, size = 0x1000, scoped, tag = 'input window, operand 0, single buffered']
    #allocation3 [shape = 's32[1]{0}', space=sflag, size = 0x4, scoped, tag = 'scoped memory for tpu_custom_call.1']
    #allocation4 [shape = 's32[1]{0}', space=sflag, size = 0x4, scoped, tag = 'scoped memory for tpu_custom_call.1']
    #allocation5 [shape = 'u8[4096]{0}', space=vmem, size = 0x1000, scoped, tag = 'output window, operand 0, single buffered']
    %6 = vsyncpa [#allocation3], 0
    %7 = vsyncpa [#allocation4], 0
    // Predicated region
    $region2: #{tpu_custom_call.1} parent=1 // pred_check
      _
    $region3: #{tpu_custom_call.1} parent=1 // pred_check_branch
      %9 = sbr.rel (0) target = $region5
    $region4: #{tpu_custom_call.1} parent=1 // pred_region
      %s11 = ssub.s32 128, 128
      %12 = vsyncadd [#allocation3], %s11
      %s14 = sshll.u32 [#allocation2], 4
      %s15 = int_to_ptr.vmem [resolvable:$true] %s14
      %17 = dma.hbm_to_vmem [thread:$0]  %s0, 128, %s15, [#allocation3]
    $region5: #{tpu_custom_call.1} parent=1 // pred_fallthru
      _
    // Predicated region
    $region6: #{tpu_custom_call.1} parent=1 // pred_check
      _
    $region7: #{tpu_custom_call.1} parent=1 // pred_check_branch
      %19 = sbr.rel (0) target = $region9
    $region8: #{tpu_custom_call.1} parent=1 // pred_region
      %20 = dma.done [#allocation3], 128
    $region9: #{tpu_custom_call.1} parent=1 // pred_fallthru
      _
    %v21 = vld [vmem:[#allocation2] sm:$0xff]
    %v22 = vmul.f32 %v21, 1.442695
    %v23 = vpow.pop %v22
    %vm24 = vcmask 261120
    %v25 = vsel %vm24, %v23, 0.0
    %v26 = vrot.slane %v25, 4
    %v27 = vadd.f32 %v25, %v26
    %v28 = vrot.slane %v27, 2
    %v29 = vadd.f32 %v27, %v28
    %v30 = vrot.slane %v29, 1
    %v31 = vadd.f32 %v29, %v30
    %v32 = vrcp.pop %v31
    %v33 = vmul.f32 %v31, %v32
    %v34 = vsub.f32 2.0, %v33
    %v35 = vmul.f32 %v32, %v34
    %v36 = vmul.f32 %v23, %v35
    %37 = vst.msk [vmem:[#allocation5] sm:$0xff] %vm24, %v36
    // Predicated region
    $region10: #{tpu_custom_call.1} parent=1 // pred_check
      _
    $region11: #{tpu_custom_call.1} parent=1 // pred_check_branch
      %39 = sbr.rel (0) target = $region13
    $region12: #{tpu_custom_call.1} parent=1 // pred_region
      %s41 = ssub.s32 128, 128
      %42 = vsyncadd [#allocation4], %s41
      %s44 = sshll.u32 [#allocation5], 4
      %s45 = int_to_ptr.vmem [resolvable:$true] %s44
      %47 = dma.vmem_to_hbm [thread:$0]  %s45, 128, %s1, [#allocation4]
    $region13: #{tpu_custom_call.1} parent=1 // pred_fallthru
      _
    // Predicated region
    $region14: #{tpu_custom_call.1} parent=1 // pred_check
      _
    $region15: #{tpu_custom_call.1} parent=1 // pred_check_branch
      %49 = sbr.rel (0) target = $region17
    $region16: #{tpu_custom_call.1} parent=1 // pred_region
      %50 = dma.done [#allocation4], 128
    $region17: #{tpu_custom_call.1} parent=1 // pred_fallthru
      _
    %51 = vsyncpa [#allocation3], 1
    %52 = vsyncpa [#allocation4], 1

</llo_original>
